<compile_context>
chip_gen: v5e
topology: v5e:2x2
jax: 0.10.0
libtpu: 0.0.40
codegen_flags: <defaults>
</compile_context>

<pallas_src>
import functools

import jax
import jax.numpy as jnp
from jax.experimental import pallas as pl
from jax.experimental.pallas import tpu as pltpu


def _round_up(x, m):
    return ((x + m - 1) // m) * m


def _count_kernel(logits_ref, targets_ref, out_ref, *,
                  block_n, n_valid, compute_dtype):
    """Accumulate the augmented confusion counts for one sample block.

    out[i, j] = #(true == i & pred == j)  for i < C
    out[C, j] = #(pred == j)              (all-ones row -> pred marginal)
    """
    p = pl.program_id(0)                 # outer "parallel" axis (megacore)
    i = pl.program_id(1)                 # inner "arbitrary" accumulation axis
    inner = pl.num_programs(1)

    # Zero the VMEM-resident accumulator at the start of each outer slice.
    @pl.when(i == 0)
    def _():
        out_ref[...] = jnp.zeros_like(out_ref)

    logits = logits_ref[...].astype(compute_dtype)   # (bn, C)
    targets = targets_ref[...]                       # (1, bn) int32, lane-dense
    bn, c = logits.shape
    rows_p = out_ref.shape[1]                        # round_up(C + 1, 8)
    cols_p = out_ref.shape[2]                        # round_up(C, 128)

    # argmax over the class axis, first-max tie-break (== torch/jnp argmax).
    col_c = jax.lax.broadcasted_iota(jnp.int32, (bn, c), 1)
    max_val = jnp.max(logits, axis=-1, keepdims=True)
    pred = jnp.min(jnp.where(logits == max_val, col_c, jnp.int32(c)),
                   axis=-1, keepdims=True)           # (bn, 1), values in [0, C)

    # Fold the validity mask into the tiny (bn, 1) pred column: rows past the
    # true N (ragged last block / idle clamped blocks) get pred = cols_p,
    # which matches no lane of the one-hot -> zero contribution.
    gblock = p * inner + i
    row = jax.lax.broadcasted_iota(jnp.int32, (bn, 1), 0) + gblock * block_n
    pred_m = jnp.where(row < n_valid, pred, jnp.int32(cols_p))

    # One-hot masks at tile-aligned shapes, bf16 for the MXU (one compare +
    # cast per vreg; no f32 select, no full-tile AND).
    col_p = jax.lax.broadcasted_iota(jnp.int32, (bn, cols_p), 1)
    pred_oh = (col_p == pred_m).astype(jnp.bfloat16)               # (bn, cols_p)
    sub_p = jax.lax.broadcasted_iota(jnp.int32, (rows_p, bn), 0)
    true_oh = ((sub_p == targets) | (sub_p == c)).astype(jnp.bfloat16)  # (rows_p, bn)

    # counts += true_oh @ pred_oh   (single MXU matmul, f32 accumulation)
    out_ref[0] += jnp.dot(true_oh, pred_oh, preferred_element_type=jnp.float32)
    # TODO(synk): for tiny C, pack 128//C samples per vreg row (grouped argmax)
    # to cut the remaining VPU work (review item #9).


_VMEM_BUDGET = 24 << 20  # keep comfortably inside the 32 MiB default scoped limit


def macro_f1_score(predicted_logits, true_targets, n_classes, *,
                   block_n=8192, upcast_low_precision=False):
    """Pallas implementation of MacroF1ScoreMetric.forward. Returns a scalar.

    Set upcast_low_precision=True on v5e (no bf16 VALU); on v6e/v7x bf16
    logits are processed natively.  Use block_n=4096 on v5e if not raising
    the scoped VMEM limit.
    """
    c = predicted_logits.shape[-1]
    logits2d = predicted_logits.reshape(-1, c)                   # native dtype
    targets_row = true_targets.reshape(1, -1).astype(jnp.int32)  # lane-dense
    n = logits2d.shape[0]

    rows_p = _round_up(c + 1, 8)
    cols_p = _round_up(c, 128)

    # Compute dtype: keep bf16/f32 as-is (argmax is exact), upcast anything
    # else (or everything, on v5e).
    if (not upcast_low_precision
            and logits2d.dtype in (jnp.dtype(jnp.bfloat16), jnp.dtype(jnp.float32))):
        compute_dtype = logits2d.dtype
    else:
        compute_dtype = jnp.float32

    # Sample-block size: multiple of 128, scaled down for wide class dims.
    bn = max(128, min(block_n, (block_n * 128) // cols_p))
    bn = max(128, (bn // 128) * 128)
    bn = min(bn, _round_up(n, 128))

    # VMEM budget: double-buffered logits + targets, resident accumulator,
    # in-kernel one-hot temporaries.  Shrink bn first; raise the scoped limit
    # only if the (C+1) x C output block alone is big.
    lbytes = jnp.dtype(logits2d.dtype).itemsize

    def vmem_est(bn_):
        return (2 * bn_ * c * lbytes              # logits blocks (double buffer)
                + 2 * 8 * bn_ * 4                 # targets blocks (sublane-padded)
                + 2 * rows_p * cols_p * 4         # output accumulator block
                + bn_ * cols_p * 2                # pred one-hot (bf16)
                + rows_p * bn_ * 2                # true one-hot (bf16)
                + 2 * bn_ * c * 4)                # argmax temporaries

    while vmem_est(bn) > _VMEM_BUDGET and bn > 128:
        bn = max(128, ((bn // 2) // 128) * 128)
    vmem_limit = None
    if vmem_est(bn) > _VMEM_BUDGET:
        vmem_limit = min(int(vmem_est(bn) * 1.4) + (4 << 20), 64 << 20)
    # TODO(synk): for C >~ 1k the untiled (C+1) x C output block should be
    # tiled along the class axis (v7x 64 MiB VMEM ceiling, review item #7).

    grid_n = pl.cdiv(n, bn)                  # ragged last block, no wrapper pad
    outer = 2 if grid_n >= 2 else 1          # 2-way split keeps v7x megacore
    grid_inner = pl.cdiv(grid_n, outer)
    last_block = grid_n - 1                  # clamp idle tail steps in-bounds

    kernel = functools.partial(_count_kernel, block_n=bn, n_valid=n,
                               compute_dtype=compute_dtype)
    counts = pl.pallas_call(
        kernel,
        out_shape=jax.ShapeDtypeStruct((outer, rows_p, cols_p), jnp.float32),
        grid=(outer, grid_inner),
        in_specs=[
            pl.BlockSpec(
                (bn, c),
                lambda p, i: (jnp.minimum(p * grid_inner + i, last_block), 0)),
            pl.BlockSpec(
                (1, bn),
                lambda p, i: (0, jnp.minimum(p * grid_inner + i, last_block))),
        ],
        # Same output block across the inner axis -> VMEM-resident accumulator.
        out_specs=pl.BlockSpec((1, rows_p, cols_p), lambda p, i: (p, 0, 0)),
        compiler_params=pltpu.CompilerParams(
            dimension_semantics=("parallel", "arbitrary"),
            vmem_limit_bytes=vmem_limit),
    )(logits2d, targets_row)

    # Finalize (O(C^2), plain XLA): diag / marginals / safe-divide / mean.
    acc = counts[0] if outer == 1 else jnp.sum(counts, axis=0)  # (rows_p, cols_p)
    conf = acc[:c, :c]                       # [true, pred]
    pred_cnt = acc[c, :c]                    # #(pred == class)
    tp = jnp.diagonal(conf)                  # #(pred == class & true == class)
    true_cnt = jnp.sum(conf, axis=1)         # #(true == class)
    den = pred_cnt + true_cnt                # == 2*tp + fp + fn
    f1 = jnp.where(den == 0.0, jnp.zeros_like(den), 2.0 * tp / den)
    k = min(n_classes, c)                    # classes >= C always have F1 == 0
    return jnp.sum(f1[:k]) / jnp.float32(n_classes)


def _macro_f1_ref(predicted_logits, true_targets, n_classes):
    """Pure-JAX reference mirroring the PyTorch module (sanity check)."""
    pred = jnp.argmax(predicted_logits, axis=-1).reshape(-1)
    true = true_targets.reshape(-1)
    f1s = []
    for cc in range(n_classes):
        tp = jnp.sum(((pred == cc) & (true == cc)).astype(jnp.float32))
        fp = jnp.sum(((pred == cc) & (true != cc)).astype(jnp.float32))
        fn = jnp.sum(((pred != cc) & (true == cc)).astype(jnp.float32))
        den = 2 * tp + fp + fn
        f1s.append(jnp.where(den == 0, 0.0, 2 * tp / den))
    return jnp.mean(jnp.stack(f1s))


if __name__ == "__main__":
    key = jax.random.PRNGKey(0)

    # Case 1: tiny shapes matching the module's typical use (single block).
    n_classes = 4
    batch, seq = 2, 8
    k_logits, k_targets, k2_logits, k2_targets = jax.random.split(key, 4)
    predicted_logits = jax.random.normal(
        k_logits, (batch, seq, n_classes), dtype=jnp.float32)
    true_targets = jax.random.randint(
        k_targets, (batch, seq), 0, n_classes, dtype=jnp.int32)
    result = macro_f1_score(predicted_logits, true_targets, n_classes)
    result = jax.block_until_ready(result)
    ref = _macro_f1_ref(predicted_logits, true_targets, n_classes)
    assert jnp.allclose(result, ref, atol=1e-6), (result, ref)

    # Case 2: non-128-aligned N with a small block_n to exercise the ragged
    # boundary, the VMEM accumulator and the 2-way outer split.
    n_classes2 = 6
    logits2 = jax.random.normal(k2_logits, (3, 100, n_classes2), dtype=jnp.float32)
    targets2 = jax.random.randint(k2_targets, (3, 100), 0, n_classes2,
                                  dtype=jnp.int32)
    result2 = macro_f1_score(logits2, targets2, n_classes2, block_n=128)
    result2 = jax.block_until_ready(result2)
    ref2 = _macro_f1_ref(logits2, targets2, n_classes2)
    assert jnp.allclose(result2, ref2, atol=1e-6), (result2, ref2)

    print("KERNEL_OK")
</pallas_src>

<mosaic_0001>
module attributes {stable_mosaic.version = 11 : i64} {
  func.func @_count_kernel(%arg0: i32, %arg1: i32, %arg2: memref<128x4xf32, #tpu.memory_space<vmem>>, %arg3: memref<1x128xi32, #tpu.memory_space<vmem>>, %arg4: memref<1x8x128xf32, #tpu.memory_space<vmem>>) attributes {dimension_semantics = [#tpu.dimension_semantics<parallel>, #tpu.dimension_semantics<arbitrary>], iteration_bounds = array<i64: 1, 1>, scalar_prefetch = 0 : i64, scratch_operands = 0 : i64, tpu.core_type = #tpu.core_type<tc>, window_params = [{transform_indices = @transform_0, window_bounds = array<i64: 128, 4>}, {transform_indices = @transform_1, window_bounds = array<i64: 1, 128>}, {transform_indices = @transform_2, window_bounds = array<i64: 1, 8, 128>}]} {
    %c0_i32 = arith.constant 0 : i32
    %0 = arith.cmpi eq, %arg1, %c0_i32 : i32
    %1 = arith.extui %0 : i1 to i32
    %c0_i32_0 = arith.constant 0 : i32
    %2 = arith.cmpi ne, %1, %c0_i32_0 : i32
    scf.if %2 {
      %cst_14 = arith.constant 0.000000e+00 : f32
      %46 = vector.broadcast %cst_14 : f32 to vector<1x8x128xf32>
      %c0_15 = arith.constant 0 : index
      %c0_16 = arith.constant 0 : index
      %c0_17 = arith.constant 0 : index
      %47 = vector.load %arg4[%c0_15, %c0_16, %c0_17] : memref<1x8x128xf32, #tpu.memory_space<vmem>>, vector<1x8x128xf32>
      tpu.vector_store %arg4[%c0_15, %c0_16, %c0_17], %46 {strides = array<i32>} : memref<1x8x128xf32, #tpu.memory_space<vmem>>, vector<1x8x128xf32>,
    } else {
    }
    %c0 = arith.constant 0 : index
    %c0_1 = arith.constant 0 : index
    %3 = vector.load %arg2[%c0, %c0_1] : memref<128x4xf32, #tpu.memory_space<vmem>>, vector<128x4xf32>
    %c0_2 = arith.constant 0 : index
    %c0_3 = arith.constant 0 : index
    %4 = vector.load %arg3[%c0_2, %c0_3] : memref<1x128xi32, #tpu.memory_space<vmem>>, vector<1x128xi32>
    %5 = tpu.iota {dimensions = array<i32: 1>} : vector<128x4xi32>
    %cst = arith.constant dense<0xFF800000> : vector<128xf32>
    %6 = vector.multi_reduction <maximumf>, %3, %cst [1] : vector<128x4xf32> to vector<128xf32>
    %7 = vector.shape_cast %6 : vector<128xf32> to vector<128x1xf32>
    %8 = vector.broadcast %7 : vector<128x1xf32> to vector<128x4xf32>
    %9 = arith.cmpf oeq, %3, %8 : vector<128x4xf32>
    %c4_i32 = arith.constant 4 : i32
    %10 = vector.broadcast %c4_i32 : i32 to vector<128x4xi32>
    %11 = arith.select %9, %5, %10 : vector<128x4xi1>, vector<128x4xi32>
    %cst_4 = arith.constant dense<2147483647> : vector<128xi32>
    %12 = vector.multi_reduction <minsi>, %11, %cst_4 [1] : vector<128x4xi32> to vector<128xi32>
    %13 = vector.shape_cast %12 : vector<128xi32> to vector<128x1xi32>
    %c1_i32 = arith.constant 1 : i32
    %14 = arith.muli %arg0, %c1_i32 : i32
    %15 = arith.addi %14, %arg1 : i32
    %16 = tpu.iota {dimensions = array<i32: 0>} : vector<128x1xi32>
    %c128_i32 = arith.constant 128 : i32
    %17 = arith.muli %15, %c128_i32 : i32
    %18 = vector.broadcast %17 : i32 to vector<128x1xi32>
    %19 = arith.addi %16, %18 : vector<128x1xi32>
    %c16_i32 = arith.constant 16 : i32
    %20 = vector.broadcast %c16_i32 : i32 to vector<128x1xi32>
    %21 = arith.cmpi slt, %19, %20 : vector<128x1xi32>
    %c128_i32_5 = arith.constant 128 : i32
    %22 = vector.broadcast %c128_i32_5 : i32 to vector<128x1xi32>
    %23 = arith.select %21, %13, %22 : vector<128x1xi1>, vector<128x1xi32>
    %24 = tpu.iota {dimensions = array<i32: 1>} : vector<128x128xi32>
    %25 = vector.broadcast %23 : vector<128x1xi32> to vector<128x128xi32>
    %26 = arith.cmpi eq, %24, %25 : vector<128x128xi32>
    %27 = arith.extui %26 : vector<128x128xi1> to vector<128x128xi32>
    %28 = arith.sitofp %27 : vector<128x128xi32> to vector<128x128xf32>
    %29 = arith.truncf %28 : vector<128x128xf32> to vector<128x128xbf16>
    %30 = tpu.iota {dimensions = array<i32: 0>} : vector<8x128xi32>
    %31 = vector.broadcast %4 : vector<1x128xi32> to vector<8x128xi32>
    %32 = arith.cmpi eq, %30, %31 : vector<8x128xi32>
    %c4_i32_6 = arith.constant 4 : i32
    %33 = vector.broadcast %c4_i32_6 : i32 to vector<8x128xi32>
    %34 = arith.cmpi eq, %30, %33 : vector<8x128xi32>
    %35 = arith.ori %32, %34 : vector<8x128xi1>
    %36 = arith.extui %35 : vector<8x128xi1> to vector<8x128xi32>
    %37 = arith.sitofp %36 : vector<8x128xi32> to vector<8x128xf32>
    %38 = arith.truncf %37 : vector<8x128xf32> to vector<8x128xbf16>
    %c0_7 = arith.constant 0 : index
    %c0_8 = arith.constant 0 : index
    %c0_9 = arith.constant 0 : index
    %39 = vector.load %arg4[%c0_7, %c0_8, %c0_9] : memref<1x8x128xf32, #tpu.memory_space<vmem>>, vector<1x8x128xf32>
    %40 = vector.shape_cast %39 : vector<1x8x128xf32> to vector<8x128xf32>
    %cst_10 = arith.constant dense<0.000000e+00> : vector<8x128xf32>
    %41 = tpu.matmul %38, %29, %cst_10 {dimension_numbers = #tpu.dot_dimension_numbers<[1], [0], [0], [1], [0, 0, 1, 1], [], []>} : vector<8x128xbf16>, vector<128x128xbf16>, vector<8x128xf32> -> vector<8x128xf32>
    %42 = arith.addf %40, %41 : vector<8x128xf32>
    %c0_11 = arith.constant 0 : index
    %c0_12 = arith.constant 0 : index
    %c0_13 = arith.constant 0 : index
    %43 = vector.load %arg4[%c0_11, %c0_12, %c0_13] : memref<1x8x128xf32, #tpu.memory_space<vmem>>, vector<1x8x128xf32>
    %44 = vector.shape_cast %43 : vector<1x8x128xf32> to vector<8x128xf32>
    %45 = vector.shape_cast %42 : vector<8x128xf32> to vector<1x8x128xf32>
    tpu.vector_store %arg4[%c0_11, %c0_12, %c0_13], %45 {strides = array<i32>} : memref<1x8x128xf32, #tpu.memory_space<vmem>>, vector<1x8x128xf32>,
    return
  }
  func.func @transform_0(%arg0: i32, %arg1: i32) -> (i32, i32) {
    %c1_i32 = arith.constant 1 : i32
    %0 = arith.muli %arg0, %c1_i32 : i32
    %1 = arith.addi %0, %arg1 : i32
    %c0_i32 = arith.constant 0 : i32
    %2 = arith.minsi %1, %c0_i32 : i32
    %c0_i32_0 = arith.constant 0 : i32
    %c0_i32_1 = arith.constant 0 : i32
    return %2, %c0_i32_0 : i32, i32
  }
  func.func @transform_1(%arg0: i32, %arg1: i32) -> (i32, i32) {
    %c1_i32 = arith.constant 1 : i32
    %0 = arith.muli %arg0, %c1_i32 : i32
    %1 = arith.addi %0, %arg1 : i32
    %c0_i32 = arith.constant 0 : i32
    %2 = arith.minsi %1, %c0_i32 : i32
    %c0_i32_0 = arith.constant 0 : i32
    %c0_i32_1 = arith.constant 0 : i32
    return %c0_i32_0, %2 : i32, i32
  }
  func.func @transform_2(%arg0: i32, %arg1: i32) -> (i32, i32, i32) {
    %c0_i32 = arith.constant 0 : i32
    %c0_i32_0 = arith.constant 0 : i32
    %c0_i32_1 = arith.constant 0 : i32
    return %arg0, %c0_i32, %c0_i32_0 : i32, i32, i32
  }
}

</mosaic_0001>

<llo_original>
// kernel: tpu_custom_call.1
$region0: #{tpu_custom_call.1}
  #allocation0 [shape = 'u32[]', space=smem, size = 0x4, offset = 0x4, fixed_abs, tag = 'smem constant byte address 0x4 - core index']
  #allocation1 [shape = 'u32[72,128]{1,0:T(1,128)}', space=vmem, size = 0x9000, scoped, tag = 'internal scratch']
  %s0 = inlined_call_operand.vmem [shape: f32[16,4], index: 0, kind: input, shape index: {}]
  %s1 = inlined_call_operand.vmem [shape: s32[1,16], index: 1, kind: input, shape index: {}]
  %s2 = inlined_call_operand.hbm [shape: f32[1,8,128], index: 2, kind: output, shape index: {}]
  %s3 = sld [smem:[#allocation0]]
  $region22: #{tpu_custom_call.1} parent=0
    _
  %s5 = ssub.s32 1, %s3
  %s6 = scalar_select 0, %s5, %s3
  $region1: #{tpu_custom_call.1} parent=0
    #allocation2 [shape = 'u8[4096]{0}', space=vmem, size = 0x1000, scoped, tag = 'output window, operand 0, single buffered']
    #allocation3 [shape = 's32[1]{0}', space=sflag, size = 0x4, scoped, tag = 'scoped memory for tpu_custom_call.1']
    %7 = vsyncpa [#allocation3], 0
    // Predicated region
    $region2: #{tpu_custom_call.1} parent=1 // pred_check
      _
    $region3: #{tpu_custom_call.1} parent=1 // pred_check_branch
      %9 = sbr.rel (0) target = $region5
    $region4: #{tpu_custom_call.1} parent=1 // pred_region
      %s10 = sadd.s32 0, 0
      %p11 = scmp.lt.s32.totalorder %s10, 0
      %s12 = scalar_select %p11, %s10, 0
      %s13 = smul.u32 16, %s12
      %s14 = ssub.s32 2, %s13
      %s15 = smul.u32 8, %s14
      %p16 = scmp.lt.s32.totalorder %s13, 1
      %s17 = scalar_select %p16, %s13, 1
      %s18 = smul.addr %s17, 8
      %s19 = scalar_lea.vmem %s0, %s18
      %s20 = sadd.s32 0, 0
      %p21 = scmp.lt.s32.totalorder %s20, 0
      %s22 = scalar_select %p21, %s20, 0
      %s23 = smul.u32 16, %s22
      %s24 = ssub.s32 2, %s23
      %s25 = smul.u32 8, %s24
    $region5: #{tpu_custom_call.1} parent=1 // pred_fallthru
      _
    // Predicated region
    $region6: #{tpu_custom_call.1} parent=1 // pred_check
      _
    $region7: #{tpu_custom_call.1} parent=1 // pred_check_branch
      %27 = sbr.rel (0) target = $region9
    $region8: #{tpu_custom_call.1} parent=1 // pred_region
      %s28 = sadd.s32 0, 0
      %p29 = scmp.lt.s32.totalorder %s28, 0
      %s30 = scalar_select %p29, %s28, 0
      %p31 = scmp.lt.s32.totalorder %s30, 0
      %s32 = scalar_select %p31, %s30, 0
      %s33 = scalar_lea.vmem %s1, %s32
      %s34 = sadd.s32 0, 0
      %p35 = scmp.lt.s32.totalorder %s34, 0
      %s36 = scalar_select %p35, %s34, 0
    $region9: #{tpu_custom_call.1} parent=1 // pred_fallthru
      _
    %s37 = sadd.s32 0, 0
    %p38 = scmp.lt.s32.totalorder %s37, 0
    %s39 = scalar_select %p38, %s37, 0
    %s40 = smul.u32 16, %s39
    %s41 = ssub.s32 2, %s40
    %s42 = smul.u32 8, %s41
    %p43 = scmp.lt.s32.totalorder %s40, 1
    %s44 = scalar_select %p43, %s40, 1
    %s45 = smul.addr %s44, 8
    %s46 = scalar_lea.vmem %s0, %s45
    %s47 = sadd.s32 0, 0
    %p48 = scmp.lt.s32.totalorder %s47, 0
    %s49 = scalar_select %p48, %s47, 0
    %p50 = scmp.lt.s32.totalorder %s49, 0
    %s51 = scalar_select %p50, %s49, 0
    %s52 = scalar_lea.vmem %s1, %s51
    %s53 = sadd.s32 0, 0
    %p54 = scmp.lt.s32.totalorder %s53, 0
    %s55 = scalar_select %p54, %s53, 0
    %s56 = smul.u32 16, %s55
    %s57 = ssub.s32 2, %s56
    %s58 = smul.u32 8, %s57
    %p59 = scmp.lt.s32.totalorder %s56, 1
    %s60 = scalar_select %p59, %s56, 1
    %s61 = smul.addr %s60, 8
    %s62 = scalar_lea.vmem %s0, %s61
    %s63 = sadd.s32 0, 0
    %p64 = scmp.lt.s32.totalorder %s63, 0
    %s65 = scalar_select %p64, %s63, 0
    %s66 = smul.u32 16, %s65
    %s67 = ssub.s32 2, %s66
    %s68 = smul.u32 8, %s67
    %s69 = sadd.s32 0, 0
    %p70 = scmp.lt.s32.totalorder %s69, 0
    %s71 = scalar_select %p70, %s69, 0
    %p72 = scmp.lt.s32.totalorder %s71, 0
    %s73 = scalar_select %p72, %s71, 0
    %s74 = scalar_lea.vmem %s1, %s73
    %s75 = sadd.s32 0, 0
    %p76 = scmp.lt.s32.totalorder %s75, 0
    %s77 = scalar_select %p76, %s75, 0
    %p78 = scmp.eq.s32.totalorder 0, 0
    // Predicated region
    $region10: #{tpu_custom_call.1} parent=1 // pred_check
      %p79 = pneg %p78
    $region11: #{tpu_custom_call.1} parent=1 // pred_check_branch
      %81 = sbr.rel (%p79) target = $region13
    $region12: #{tpu_custom_call.1} parent=1 // pred_region
      %82 = vst [vmem:[#allocation2] sm:$0xff] 0.0
    $region13: #{tpu_custom_call.1} parent=1 // pred_fallthru
      _
    %v83 = vld [vmem:[%s62] sm:$0xff]
    %v84 = vld [vmem:[%s62 + $0x8] sm:$0xff]
    %v85 = vld [vmem:[%s62 + $0x10] sm:$0xff]
    %v86 = vld [vmem:[%s62 + $0x18] sm:$0xff]
    %v87 = vld [vmem:[%s62 + $0x20] sm:$0xff]
    %v88 = vld [vmem:[%s62 + $0x28] sm:$0xff]
    %v89 = vld [vmem:[%s62 + $0x30] sm:$0xff]
    %v90 = vld [vmem:[%s62 + $0x38] sm:$0xff]
    %v91 = vld [vmem:[%s62 + $0x40] sm:$0xff]
    %v92 = vld [vmem:[%s62 + $0x48] sm:$0xff]
    %v93 = vld [vmem:[%s62 + $0x50] sm:$0xff]
    %v94 = vld [vmem:[%s62 + $0x58] sm:$0xff]
    %v95 = vld [vmem:[%s62 + $0x60] sm:$0xff]
    %v96 = vld [vmem:[%s62 + $0x68] sm:$0xff]
    %v97 = vld [vmem:[%s62 + $0x70] sm:$0xff]
    %v98 = vld [vmem:[%s62 + $0x78] sm:$0xff]
    %v99 = vld [vmem:[%s74] sm:$0x1]
    %v100 = vlaneseq
    %v101 = vand.u32 %v100, 127
    %vm102 = vcmask 31744
    %v103 = vsel %vm102, %v83, -inf
    %104 = vmax.xlane.f32.xlu0 %v103
    %v105 = vpop.xlane.xlu0 %104
    %v106 = vsel %vm102, %v84, -inf
    %107 = vmax.xlane.f32.xlu0 %v106
    %v108 = vpop.xlane.xlu0 %107
    %v109 = vsel %vm102, %v85, -inf
    %110 = vmax.xlane.f32.xlu0 %v109
    %v111 = vpop.xlane.xlu0 %110
    %v112 = vsel %vm102, %v86, -inf
    %113 = vmax.xlane.f32.xlu0 %v112
    %v114 = vpop.xlane.xlu0 %113
    %v115 = vsel %vm102, %v87, -inf
    %116 = vmax.xlane.f32.xlu0 %v115
    %v117 = vpop.xlane.xlu0 %116
    %v118 = vsel %vm102, %v88, -inf
    %119 = vmax.xlane.f32.xlu0 %v118
    %v120 = vpop.xlane.xlu0 %119
    %v121 = vsel %vm102, %v89, -inf
    %122 = vmax.xlane.f32.xlu0 %v121
    %v123 = vpop.xlane.xlu0 %122
    %v124 = vsel %vm102, %v90, -inf
    %125 = vmax.xlane.f32.xlu0 %v124
    %v126 = vpop.xlane.xlu0 %125
    %v127 = vsel %vm102, %v91, -inf
    %128 = vmax.xlane.f32.xlu0 %v127
    %v129 = vpop.xlane.xlu0 %128
    %v130 = vsel %vm102, %v92, -inf
    %131 = vmax.xlane.f32.xlu0 %v130
    %v132 = vpop.xlane.xlu0 %131
    %v133 = vsel %vm102, %v93, -inf
    %134 = vmax.xlane.f32.xlu0 %v133
    %v135 = vpop.xlane.xlu0 %134
    %v136 = vsel %vm102, %v94, -inf
    %137 = vmax.xlane.f32.xlu0 %v136
    %v138 = vpop.xlane.xlu0 %137
    %v139 = vsel %vm102, %v95, -inf
    %140 = vmax.xlane.f32.xlu0 %v139
    %v141 = vpop.xlane.xlu0 %140
    %v142 = vsel %vm102, %v96, -inf
    %143 = vmax.xlane.f32.xlu0 %v142
    %v144 = vpop.xlane.xlu0 %143
    %v145 = vsel %vm102, %v97, -inf
    %146 = vmax.xlane.f32.xlu0 %v145
    %v147 = vpop.xlane.xlu0 %146
    %v148 = vsel %vm102, %v98, -inf
    %149 = vmax.xlane.f32.xlu0 %v148
    %v150 = vpop.xlane.xlu0 %149
    %vm151 = vcmp.eq.f32.partialorder %v83, %v105
    %vm152 = vcmp.eq.f32.partialorder %v84, %v108
    %vm153 = vcmp.eq.f32.partialorder %v85, %v111
    %vm154 = vcmp.eq.f32.partialorder %v86, %v114
    %vm155 = vcmp.eq.f32.partialorder %v87, %v117
    %vm156 = vcmp.eq.f32.partialorder %v88, %v120
    %vm157 = vcmp.eq.f32.partialorder %v89, %v123
    %vm158 = vcmp.eq.f32.partialorder %v90, %v126
    %vm159 = vcmp.eq.f32.partialorder %v91, %v129
    %vm160 = vcmp.eq.f32.partialorder %v92, %v132
    %vm161 = vcmp.eq.f32.partialorder %v93, %v135
    %vm162 = vcmp.eq.f32.partialorder %v94, %v138
    %vm163 = vcmp.eq.f32.partialorder %v95, %v141
    %vm164 = vcmp.eq.f32.partialorder %v96, %v144
    %vm165 = vcmp.eq.f32.partialorder %v97, %v147
    %vm166 = vcmp.eq.f32.partialorder %v98, %v150
    %v167 = vsel %vm151, %v101, 4
    %v168 = vsel %vm152, %v101, 4
    %v169 = vsel %vm153, %v101, 4
    %v170 = vsel %vm154, %v101, 4
    %v171 = vsel %vm155, %v101, 4
    %v172 = vsel %vm156, %v101, 4
    %v173 = vsel %vm157, %v101, 4
    %v174 = vsel %vm158, %v101, 4
    %v175 = vsel %vm159, %v101, 4
    %v176 = vsel %vm160, %v101, 4
    %v177 = vsel %vm161, %v101, 4
    %v178 = vsel %vm162, %v101, 4
    %v179 = vsel %vm163, %v101, 4
    %v180 = vsel %vm164, %v101, 4
    %v181 = vsel %vm165, %v101, 4
    %v182 = vsel %vm166, %v101, 4
    %v183 = vsel %vm102, %v167, 2147483647
    %v184 = vand.u32 %v183, 65535
    %v185 = vshra.s32 %v183, 16
    %v186 = vcvt.s32.f32 %v184
    %v187 = vcvt.s32.f32 %v185
    %188 = vmin.xlane.f32.xlu0 %v187
    %v189 = vpop.xlane.xlu0 %188
    %vm190 = vcmp.eq.f32.partialorder %v187, %v189
    %v191 = vsel %vm190, %v186, inf
    %192 = vmin.xlane.f32.xlu0 %v191
    %v193 = vpop.xlane.xlu0 %192
    %v194 = vcvt.f32.s32 %v193
    %v195 = vcvt.f32.s32 %v189
    %v196 = vshll.u32 %v195, 16
    %v197 = vadd.s32 %v196, %v194
    %v198 = vsel %vm102, %v168, 2147483647
    %v199 = vand.u32 %v198, 65535
    %v200 = vshra.s32 %v198, 16
    %v201 = vcvt.s32.f32 %v199
    %v202 = vcvt.s32.f32 %v200
    %203 = vmin.xlane.f32.xlu0 %v202
    %v204 = vpop.xlane.xlu0 %203
    %vm205 = vcmp.eq.f32.partialorder %v202, %v204
    %v206 = vsel %vm205, %v201, inf
    %207 = vmin.xlane.f32.xlu0 %v206
    %v208 = vpop.xlane.xlu0 %207
    %v209 = vcvt.f32.s32 %v208
    %v210 = vcvt.f32.s32 %v204
    %v211 = vshll.u32 %v210, 16
    %v212 = vadd.s32 %v211, %v209
    %v213 = vsel %vm102, %v169, 2147483647
    %v214 = vand.u32 %v213, 65535
    %v215 = vshra.s32 %v213, 16
    %v216 = vcvt.s32.f32 %v214
    %v217 = vcvt.s32.f32 %v215
    %218 = vmin.xlane.f32.xlu0 %v217
    %v219 = vpop.xlane.xlu0 %218
    %vm220 = vcmp.eq.f32.partialorder %v217, %v219
    %v221 = vsel %vm220, %v216, inf
    %222 = vmin.xlane.f32.xlu0 %v221
    %v223 = vpop.xlane.xlu0 %222
    %v224 = vcvt.f32.s32 %v223
    %v225 = vcvt.f32.s32 %v219
    %v226 = vshll.u32 %v225, 16
    %v227 = vadd.s32 %v226, %v224
    %v228 = vsel %vm102, %v170, 2147483647
    %v229 = vand.u32 %v228, 65535
    %v230 = vshra.s32 %v228, 16
    %v231 = vcvt.s32.f32 %v229
    %v232 = vcvt.s32.f32 %v230
    %233 = vmin.xlane.f32.xlu0 %v232
    %v234 = vpop.xlane.xlu0 %233
    %vm235 = vcmp.eq.f32.partialorder %v232, %v234
    %v236 = vsel %vm235, %v231, inf
    %237 = vmin.xlane.f32.xlu0 %v236
    %v238 = vpop.xlane.xlu0 %237
    %v239 = vcvt.f32.s32 %v238
    %v240 = vcvt.f32.s32 %v234
    %v241 = vshll.u32 %v240, 16
    %v242 = vadd.s32 %v241, %v239
    %v243 = vsel %vm102, %v171, 2147483647
    %v244 = vand.u32 %v243, 65535
    %v245 = vshra.s32 %v243, 16
    %v246 = vcvt.s32.f32 %v244
    %v247 = vcvt.s32.f32 %v245
    %248 = vmin.xlane.f32.xlu0 %v247
    %v249 = vpop.xlane.xlu0 %248
    %vm250 = vcmp.eq.f32.partialorder %v247, %v249
    %v251 = vsel %vm250, %v246, inf
    %252 = vmin.xlane.f32.xlu0 %v251
    %v253 = vpop.xlane.xlu0 %252
    %v254 = vcvt.f32.s32 %v253
    %v255 = vcvt.f32.s32 %v249
    %v256 = vshll.u32 %v255, 16
    %v257 = vadd.s32 %v256, %v254
    %v258 = vsel %vm102, %v172, 2147483647
    %v259 = vand.u32 %v258, 65535
    %v260 = vshra.s32 %v258, 16
    %v261 = vcvt.s32.f32 %v259
    %v262 = vcvt.s32.f32 %v260
    %263 = vmin.xlane.f32.xlu0 %v262
    %v264 = vpop.xlane.xlu0 %263
    %vm265 = vcmp.eq.f32.partialorder %v262, %v264
    %v266 = vsel %vm265, %v261, inf
    %267 = vmin.xlane.f32.xlu0 %v266
    %v268 = vpop.xlane.xlu0 %267
    %v269 = vcvt.f32.s32 %v268
    %v270 = vcvt.f32.s32 %v264
    %v271 = vshll.u32 %v270, 16
    %v272 = vadd.s32 %v271, %v269
    %v273 = vsel %vm102, %v173, 2147483647
    %v274 = vand.u32 %v273, 65535
    %v275 = vshra.s32 %v273, 16
    %v276 = vcvt.s32.f32 %v274
    %v277 = vcvt.s32.f32 %v275
    %278 = vmin.xlane.f32.xlu0 %v277
    %v279 = vpop.xlane.xlu0 %278
    %vm280 = vcmp.eq.f32.partialorder %v277, %v279
    %v281 = vsel %vm280, %v276, inf
    %282 = vmin.xlane.f32.xlu0 %v281
    %v283 = vpop.xlane.xlu0 %282
    %v284 = vcvt.f32.s32 %v283
    %v285 = vcvt.f32.s32 %v279
    %v286 = vshll.u32 %v285, 16
    %v287 = vadd.s32 %v286, %v284
    %v288 = vsel %vm102, %v174, 2147483647
    %v289 = vand.u32 %v288, 65535
    %v290 = vshra.s32 %v288, 16
    %v291 = vcvt.s32.f32 %v289
    %v292 = vcvt.s32.f32 %v290
    %293 = vmin.xlane.f32.xlu0 %v292
    %v294 = vpop.xlane.xlu0 %293
    %vm295 = vcmp.eq.f32.partialorder %v292, %v294
    %v296 = vsel %vm295, %v291, inf
    %297 = vmin.xlane.f32.xlu0 %v296
    %v298 = vpop.xlane.xlu0 %297
    %v299 = vcvt.f32.s32 %v298
    %v300 = vcvt.f32.s32 %v294
    %v301 = vshll.u32 %v300, 16
    %v302 = vadd.s32 %v301, %v299
    %v303 = vsel %vm102, %v175, 2147483647
    %v304 = vand.u32 %v303, 65535
    %v305 = vshra.s32 %v303, 16
    %v306 = vcvt.s32.f32 %v304
    %v307 = vcvt.s32.f32 %v305
    %308 = vmin.xlane.f32.xlu0 %v307
    %v309 = vpop.xlane.xlu0 %308
    %vm310 = vcmp.eq.f32.partialorder %v307, %v309
    %v311 = vsel %vm310, %v306, inf
    %312 = vmin.xlane.f32.xlu0 %v311
    %v313 = vpop.xlane.xlu0 %312
    %v314 = vcvt.f32.s32 %v313
    %v315 = vcvt.f32.s32 %v309
    %v316 = vshll.u32 %v315, 16
    %v317 = vadd.s32 %v316, %v314
    %v318 = vsel %vm102, %v176, 2147483647
    %v319 = vand.u32 %v318, 65535
    %v320 = vshra.s32 %v318, 16
    %v321 = vcvt.s32.f32 %v319
    %v322 = vcvt.s32.f32 %v320
    %323 = vmin.xlane.f32.xlu0 %v322
    %v324 = vpop.xlane.xlu0 %323
    %vm325 = vcmp.eq.f32.partialorder %v322, %v324
    %v326 = vsel %vm325, %v321, inf
    %327 = vmin.xlane.f32.xlu0 %v326
    %v328 = vpop.xlane.xlu0 %327
    %v329 = vcvt.f32.s32 %v328
    %v330 = vcvt.f32.s32 %v324
    %v331 = vshll.u32 %v330, 16
    %v332 = vadd.s32 %v331, %v329
    %v333 = vsel %vm102, %v177, 2147483647
    %v334 = vand.u32 %v333, 65535
    %v335 = vshra.s32 %v333, 16
    %v336 = vcvt.s32.f32 %v334
    %v337 = vcvt.s32.f32 %v335
    %338 = vmin.xlane.f32.xlu0 %v337
    %v339 = vpop.xlane.xlu0 %338
    %vm340 = vcmp.eq.f32.partialorder %v337, %v339
    %v341 = vsel %vm340, %v336, inf
    %342 = vmin.xlane.f32.xlu0 %v341
    %v343 = vpop.xlane.xlu0 %342
    %v344 = vcvt.f32.s32 %v343
    %v345 = vcvt.f32.s32 %v339
    %v346 = vshll.u32 %v345, 16
    %v347 = vadd.s32 %v346, %v344
    %v348 = vsel %vm102, %v178, 2147483647
    %v349 = vand.u32 %v348, 65535
    %v350 = vshra.s32 %v348, 16
    %v351 = vcvt.s32.f32 %v349
    %v352 = vcvt.s32.f32 %v350
    %353 = vmin.xlane.f32.xlu0 %v352
    %v354 = vpop.xlane.xlu0 %353
    %vm355 = vcmp.eq.f32.partialorder %v352, %v354
    %v356 = vsel %vm355, %v351, inf
    %357 = vmin.xlane.f32.xlu0 %v356
    %v358 = vpop.xlane.xlu0 %357
    %v359 = vcvt.f32.s32 %v358
    %v360 = vcvt.f32.s32 %v354
    %v361 = vshll.u32 %v360, 16
    %v362 = vadd.s32 %v361, %v359
    %v363 = vsel %vm102, %v179, 2147483647
    %v364 = vand.u32 %v363, 65535
    %v365 = vshra.s32 %v363, 16
    %v366 = vcvt.s32.f32 %v364
    %v367 = vcvt.s32.f32 %v365
    %368 = vmin.xlane.f32.xlu0 %v367
    %v369 = vpop.xlane.xlu0 %368
    %vm370 = vcmp.eq.f32.partialorder %v367, %v369
    %v371 = vsel %vm370, %v366, inf
    %372 = vmin.xlane.f32.xlu0 %v371
    %v373 = vpop.xlane.xlu0 %372
    %v374 = vcvt.f32.s32 %v373
    %v375 = vcvt.f32.s32 %v369
    %v376 = vshll.u32 %v375, 16
    %v377 = vadd.s32 %v376, %v374
    %v378 = vsel %vm102, %v180, 2147483647
    %v379 = vand.u32 %v378, 65535
    %v380 = vshra.s32 %v378, 16
    %v381 = vcvt.s32.f32 %v379
    %v382 = vcvt.s32.f32 %v380
    %383 = vmin.xlane.f32.xlu0 %v382
    %v384 = vpop.xlane.xlu0 %383
    %vm385 = vcmp.eq.f32.partialorder %v382, %v384
    %v386 = vsel %vm385, %v381, inf
    %387 = vmin.xlane.f32.xlu0 %v386
    %v388 = vpop.xlane.xlu0 %387
    %v389 = vcvt.f32.s32 %v388
    %v390 = vcvt.f32.s32 %v384
    %v391 = vshll.u32 %v390, 16
    %v392 = vadd.s32 %v391, %v389
    %v393 = vsel %vm102, %v181, 2147483647
    %v394 = vand.u32 %v393, 65535
    %v395 = vshra.s32 %v393, 16
    %v396 = vcvt.s32.f32 %v394
    %v397 = vcvt.s32.f32 %v395
    %398 = vmin.xlane.f32.xlu0 %v397
    %v399 = vpop.xlane.xlu0 %398
    %vm400 = vcmp.eq.f32.partialorder %v397, %v399
    %v401 = vsel %vm400, %v396, inf
    %402 = vmin.xlane.f32.xlu0 %v401
    %v403 = vpop.xlane.xlu0 %402
    %v404 = vcvt.f32.s32 %v403
    %v405 = vcvt.f32.s32 %v399
    %v406 = vshll.u32 %v405, 16
    %v407 = vadd.s32 %v406, %v404
    %v408 = vsel %vm102, %v182, 2147483647
    %v409 = vand.u32 %v408, 65535
    %v410 = vshra.s32 %v408, 16
    %v411 = vcvt.s32.f32 %v409
    %v412 = vcvt.s32.f32 %v410
    %413 = vmin.xlane.f32.xlu0 %v412
    %v414 = vpop.xlane.xlu0 %413
    %vm415 = vcmp.eq.f32.partialorder %v412, %v414
    %v416 = vsel %vm415, %v411, inf
    %417 = vmin.xlane.f32.xlu0 %v416
    %v418 = vpop.xlane.xlu0 %417
    %v419 = vcvt.f32.s32 %v418
    %v420 = vcvt.f32.s32 %v414
    %v421 = vshll.u32 %v420, 16
    %v422 = vadd.s32 %v421, %v419
    %s423 = sadd.s32 0, 0
    %v424 = vlaneseq
    %v425 = vshrl.u32 %v424, 7
    %v426 = vadd.s32 %v425, 8
    %v427 = vadd.s32 %v425, 16
    %v428 = vadd.s32 %v425, 24
    %v429 = vadd.s32 %v425, 32
    %v430 = vadd.s32 %v425, 40
    %v431 = vadd.s32 %v425, 48
    %v432 = vadd.s32 %v425, 56
    %v433 = vadd.s32 %v425, 64
    %v434 = vadd.s32 %v425, 72
    %v435 = vadd.s32 %v425, 80
    %v436 = vadd.s32 %v425, 88
    %v437 = vadd.s32 %v425, 96
    %v438 = vadd.s32 %v425, 104
    %v439 = vadd.s32 %v425, 112
    %v440 = vadd.s32 %v425, 120
    %s441 = smul.u32 %s423, 128
    %v442 = vstv %s441
    %v443 = vadd.s32 %v425, %v442
    %v444 = vadd.s32 %v426, %v442
    %v445 = vadd.s32 %v427, %v442
    %v446 = vadd.s32 %v428, %v442
    %v447 = vadd.s32 %v429, %v442
    %v448 = vadd.s32 %v430, %v442
    %v449 = vadd.s32 %v431, %v442
    %v450 = vadd.s32 %v432, %v442
    %v451 = vadd.s32 %v433, %v442
    %v452 = vadd.s32 %v434, %v442
    %v453 = vadd.s32 %v435, %v442
    %v454 = vadd.s32 %v436, %v442
    %v455 = vadd.s32 %v437, %v442
    %v456 = vadd.s32 %v438, %v442
    %v457 = vadd.s32 %v439, %v442
    %v458 = vadd.s32 %v440, %v442
    %vm459 = vcmp.lt.s32.totalorder %v443, 16
    %vm460 = vcmp.lt.s32.totalorder %v444, 16
    %vm461 = vcmp.lt.s32.totalorder %v445, 16
    %vm462 = vcmp.lt.s32.totalorder %v446, 16
    %vm463 = vcmp.lt.s32.totalorder %v447, 16
    %vm464 = vcmp.lt.s32.totalorder %v448, 16
    %vm465 = vcmp.lt.s32.totalorder %v449, 16
    %vm466 = vcmp.lt.s32.totalorder %v450, 16
    %vm467 = vcmp.lt.s32.totalorder %v451, 16
    %vm468 = vcmp.lt.s32.totalorder %v452, 16
    %vm469 = vcmp.lt.s32.totalorder %v453, 16
    %vm470 = vcmp.lt.s32.totalorder %v454, 16
    %vm471 = vcmp.lt.s32.totalorder %v455, 16
    %vm472 = vcmp.lt.s32.totalorder %v456, 16
    %vm473 = vcmp.lt.s32.totalorder %v457, 16
    %vm474 = vcmp.lt.s32.totalorder %v458, 16
    %v475 = vsel %vm459, %v197, 128
    %v476 = vsel %vm460, %v212, 128
    %v477 = vsel %vm461, %v227, 128
    %v478 = vsel %vm462, %v242, 128
    %v479 = vsel %vm463, %v257, 128
    %v480 = vsel %vm464, %v272, 128
    %v481 = vsel %vm465, %v287, 128
    %v482 = vsel %vm466, %v302, 128
    %v483 = vsel %vm467, %v317, 128
    %v484 = vsel %vm468, %v332, 128
    %v485 = vsel %vm469, %v347, 128
    %v486 = vsel %vm470, %v362, 128
    %v487 = vsel %vm471, %v377, 128
    %v488 = vsel %vm472, %v392, 128
    %v489 = vsel %vm473, %v407, 128
    %v490 = vsel %vm474, %v422, 128
    %vm491 = vcmp.eq.s32.totalorder %v101, %v475
    %vm492 = vcmp.eq.s32.totalorder %v101, %v476
    %vm493 = vcmp.eq.s32.totalorder %v101, %v477
    %vm494 = vcmp.eq.s32.totalorder %v101, %v478
    %vm495 = vcmp.eq.s32.totalorder %v101, %v479
    %vm496 = vcmp.eq.s32.totalorder %v101, %v480
    %vm497 = vcmp.eq.s32.totalorder %v101, %v481
    %vm498 = vcmp.eq.s32.totalorder %v101, %v482
    %vm499 = vcmp.eq.s32.totalorder %v101, %v483
    %vm500 = vcmp.eq.s32.totalorder %v101, %v484
    %vm501 = vcmp.eq.s32.totalorder %v101, %v485
    %vm502 = vcmp.eq.s32.totalorder %v101, %v486
    %vm503 = vcmp.eq.s32.totalorder %v101, %v487
    %vm504 = vcmp.eq.s32.totalorder %v101, %v488
    %vm505 = vcmp.eq.s32.totalorder %v101, %v489
    %vm506 = vcmp.eq.s32.totalorder %v101, %v490
    %v507 = vsel %vm491, 1, 0
    %v508 = vsel %vm492, 1, 0
    %v509 = vsel %vm493, 1, 0
    %v510 = vsel %vm494, 1, 0
    %v511 = vsel %vm495, 1, 0
    %v512 = vsel %vm496, 1, 0
    %v513 = vsel %vm497, 1, 0
    %v514 = vsel %vm498, 1, 0
    %v515 = vsel %vm499, 1, 0
    %v516 = vsel %vm500, 1, 0
    %v517 = vsel %vm501, 1, 0
    %v518 = vsel %vm502, 1, 0
    %v519 = vsel %vm503, 1, 0
    %v520 = vsel %vm504, 1, 0
    %v521 = vsel %vm505, 1, 0
    %v522 = vsel %vm506, 1, 0
    %v523 = vcvt.s32.f32 %v507
    %v524 = vcvt.s32.f32 %v508
    %v525 = vcvt.s32.f32 %v509
    %v526 = vcvt.s32.f32 %v510
    %v527 = vcvt.s32.f32 %v511
    %v528 = vcvt.s32.f32 %v512
    %v529 = vcvt.s32.f32 %v513
    %v530 = vcvt.s32.f32 %v514
    %v531 = vcvt.s32.f32 %v515
    %v532 = vcvt.s32.f32 %v516
    %v533 = vcvt.s32.f32 %v517
    %v534 = vcvt.s32.f32 %v518
    %v535 = vcvt.s32.f32 %v519
    %v536 = vcvt.s32.f32 %v520
    %v537 = vcvt.s32.f32 %v521
    %v538 = vcvt.s32.f32 %v522
    %v539 = vpack.c.bf16 %v524, %v523
    %v540 = vpack.c.bf16 %v526, %v525
    %v541 = vpack.c.bf16 %v528, %v527
    %v542 = vpack.c.bf16 %v530, %v529
    %v543 = vpack.c.bf16 %v532, %v531
    %v544 = vpack.c.bf16 %v534, %v533
    %v545 = vpack.c.bf16 %v536, %v535
    %v546 = vpack.c.bf16 %v538, %v537
    %v547 = vperm.slane %v99, 0
    %vm548 = vcmp.eq.s32.totalorder %v425, %v547
    %vm549 = vcmp.eq.s32.totalorder %v425, 4
    %vm550 = vmor %vm548, %vm549
    %v551 = vsel %vm550, 1, 0
    %v552 = vcvt.s32.f32 %v551
    %v553 = vpack.c.bf16 %v552, %v552
    %v554 = vld [vmem:[#allocation2] sm:$0xff]
    %555 = vmatpush.bf16.msra.mxu0 %v546
    %556 = vmatpush.bf16.msra.mxu0 %v545
    %557 = vmatpush.bf16.msra.mxu0 %v544
    %558 = vmatpush.bf16.msra.mxu0 %v543
    %559 = vmatpush.bf16.msra.mxu0 %v542
    %560 = vmatpush.bf16.msra.mxu0 %v541
    %561 = vmatpush.bf16.msra.mxu0 %v540
    %562 = vmatpush.bf16.msra.mxu0 %v539
    %563 = vmatmul.bf16.gmra.mxu0 %v553
    %v564 = vpop.f32.mrf.mxu0
    %v565 = vadd.f32 0.0, %v564
    %v566 = vpop.f32.mrf.mxu0
    %567 = vdwg.mxu0
    %v568 = vadd.f32 %v554, %v565
    %569 = vst [vmem:[#allocation2] sm:$0xff] %v568
    // Predicated region
    $region14: #{tpu_custom_call.1} parent=1 // pred_check
      _
    $region15: #{tpu_custom_call.1} parent=1 // pred_check_branch
      %571 = sbr.rel (0) target = $region17
    $region16: #{tpu_custom_call.1} parent=1 // pred_region
      %573 = vsyncadd [#allocation3], 0
      %s575 = sshll.u32 [#allocation2], 4
      %s576 = int_to_ptr.vmem [resolvable:$true] %s575
      %s577 = sshll.u32 %s2, 4
      %s578 = int_to_ptr.hbm [resolvable:$true] %s577
      %580 = dma.vmem_to_hbm [thread:$0]  %s576, 128, %s578, [#allocation3]
    $region17: #{tpu_custom_call.1} parent=1 // pred_fallthru
      _
    // Predicated region
    $region18: #{tpu_custom_call.1} parent=1 // pred_check
      _
    $region19: #{tpu_custom_call.1} parent=1 // pred_check_branch
      %582 = sbr.rel (0) target = $region21
    $region20: #{tpu_custom_call.1} parent=1 // pred_region
      %584 = dma.done [#allocation3], 128
    $region21: #{tpu_custom_call.1} parent=1 // pred_fallthru
      _
    %585 = vsyncpa [#allocation3], 1

</llo_original>
